<compile_context>
chip_gen: v7x
topology: tpu7x:2x2x1
jax: 0.10.0
libtpu: 0.0.40
codegen_flags: <defaults>
</compile_context>

<pallas_src>
import jax
import jax.numpy as jnp
from jax.experimental import pallas as pl
from jax.experimental.pallas import tpu as pltpu


def upblock_kernel(x_ref, k_ref, ah_ref, b_ref, o_ref):
    # x_ref:  (N*H, Cin*W)   bf16  VMEM  -- input pixels, batch folded into matmul M dim
    # k_ref:  (Cin*W, TC)    bf16  VMEM  -- column tile of kron(W_conv^T, A_w^T) (conv + col-upsample)
    # ah_ref: (H2, H)        f32   VMEM  -- row-upsample matrix (align_corners=True)
    # b_ref:  (1, TC)        f32   VMEM  -- bias tile, repeated over W2
    # o_ref:  (N, H2, TC)    f32   VMEM
    n, _, _ = o_ref.shape
    h = x_ref.shape[0] // n

    # 1x1 conv + column upsample fused into one lane-dense MXU matmul over ALL batches at once.
    # Running it over H rows (not H2) is the associativity reorder -> ~30% fewer MXU FLOPs.
    t = jnp.dot(x_ref[...], k_ref[...], preferred_element_type=jnp.float32)   # (N*H, TC) f32

    ah = ah_ref[...]
    bias = b_ref[...]
    # Row upsample per batch element: small f32 matmuls, statically unrolled over N.
    for b in range(n):
        out = jnp.dot(ah, t[b * h:(b + 1) * h],
                      preferred_element_type=jnp.float32)                     # (H2, TC)
        o_ref[b] = (out + bias).astype(o_ref.dtype)


def bilinear_upsample_matrix(l_in, l_out):
    """A (l_out, l_in) matrix implementing 1-D bilinear resize, align_corners=True."""
    denom = max(l_out - 1, 1)
    src = jnp.arange(l_out, dtype=jnp.float32) * (l_in - 1) / denom
    lo = jnp.clip(jnp.floor(src).astype(jnp.int32), 0, l_in - 1)
    hi = jnp.clip(lo + 1, 0, l_in - 1)
    frac = src - lo.astype(jnp.float32)
    rows = jnp.arange(l_out)
    a = jnp.zeros((l_out, l_in), jnp.float32)
    a = a.at[rows, lo].add(1.0 - frac)
    a = a.at[rows, hi].add(frac)
    return a


def up_block(x, weight, bias):
    """x: (N, Cin, H, W); weight: (Cout, Cin) (Conv2d 1x1 weight squeezed); bias: (Cout,)."""
    n, cin, h, w = x.shape
    cout = weight.shape[0]
    h2, w2 = 2 * h, 2 * w
    cw2 = cout * w2

    # Plain-JAX glue: interpolation matrices + fused (col-upsample x 1x1-conv) kron matrix.
    ah = bilinear_upsample_matrix(h, h2)                       # (H2, H), f32
    aw = bilinear_upsample_matrix(w, w2)                       # (W2, W), f32
    # K[(ci*W + w), (co*W2 + w2)] = weight[co, ci] * aw[w2, w]
    k_mat = jnp.kron(weight.T, aw.T)                           # (Cin*W, Cout*W2)
    bias_row = jnp.repeat(bias, w2)[None, :]                   # (1, Cout*W2), f32

    # Present x as (N*H, Cin*W): batch folded into matmul M, channels folded into contraction.
    x_flat = jnp.transpose(x, (0, 2, 1, 3)).reshape(n * h, cin * w)

    # bf16 operands for the big MXU matmul; accumulation stays f32 inside the kernel.
    x_bf = x_flat.astype(jnp.bfloat16)
    k_bf = k_mat.astype(jnp.bfloat16)

    # Column tiling of the output (Cout*W2) axis: parallel work for v7x's two TensorCores,
    # each tile stays a multiple of 128 lanes; negligible overhead on single-TC chips.
    n_col_tiles = 2 if (cw2 % 256 == 0) else 1
    tc = cw2 // n_col_tiles

    flops = 2 * (n * h) * (cin * w) * cw2 + 2 * n * h2 * h * cw2
    bytes_accessed = (x_bf.size * 2 * n_col_tiles + k_bf.size * 2
                      + ah.size * 4 * n_col_tiles + bias_row.size * 4
                      + n * h2 * cw2 * 4)

    out_flat = pl.pallas_call(
        upblock_kernel,
        out_shape=jax.ShapeDtypeStruct((n, h2, cw2), x.dtype),
        grid=(n_col_tiles,),
        in_specs=[
            pl.BlockSpec((n * h, cin * w), lambda j: (0, 0)),   # x: grid-invariant
            pl.BlockSpec((cin * w, tc), lambda j: (0, j)),      # K: column tile j
            pl.BlockSpec((h2, h), lambda j: (0, 0)),            # A_h: grid-invariant
            pl.BlockSpec((1, tc), lambda j: (0, j)),            # bias: column tile j
        ],
        out_specs=pl.BlockSpec((n, h2, tc), lambda j: (0, 0, j)),
        compiler_params=pltpu.CompilerParams(
            dimension_semantics=("parallel",),
        ),
        cost_estimate=pl.CostEstimate(
            flops=flops, transcendentals=0, bytes_accessed=bytes_accessed),
    )(x_bf, k_bf, ah, bias_row)

    # (N, H2, Cout*W2) -> (N, Cout, H2, W2): layout plumbing to match the PyTorch NCHW output.
    return jnp.transpose(out_flat.reshape(n, h2, cout, w2), (0, 2, 1, 3))


def upblock_reference(x, weight, bias):
    """Plain-JAX f32 reference: gather-based bilinear (align_corners=True) + 1x1 conv."""
    _, _, h, w = x.shape
    h2, w2 = 2 * h, 2 * w

    def taps(l_in, l_out):
        src = jnp.arange(l_out, dtype=jnp.float32) * (l_in - 1) / (l_out - 1)
        lo = jnp.clip(jnp.floor(src).astype(jnp.int32), 0, l_in - 1)
        hi = jnp.clip(lo + 1, 0, l_in - 1)
        return lo, hi, src - lo.astype(jnp.float32)

    h0, h1, fh = taps(h, h2)
    w0, w1, fw = taps(w, w2)
    rows = x[:, :, h0, :] * (1 - fh)[None, None, :, None] + x[:, :, h1, :] * fh[None, None, :, None]
    up = rows[:, :, :, w0] * (1 - fw) + rows[:, :, :, w1] * fw
    out = (weight[None, :, :, None, None] * up[:, None, :, :, :]).sum(axis=2)
    return out + bias[None, :, None, None]


if __name__ == "__main__":
    key = jax.random.PRNGKey(0)
    kx, kw, kb = jax.random.split(key, 3)

    N, CIN, COUT, H, W = 2, 4, 8, 16, 16
    x = jax.random.normal(kx, (N, CIN, H, W), jnp.float32)
    # Conv2d(in_channels=4, out_channels=8, kernel_size=1) parameters (weight squeezed to (Cout, Cin)).
    weight = jax.random.normal(kw, (COUT, CIN), jnp.float32) * 0.1
    bias = jax.random.normal(kb, (COUT,), jnp.float32) * 0.1

    out = jax.block_until_ready(up_block(x, weight, bias))
    assert out.shape == (N, COUT, 2 * H, 2 * W), out.shape

    ref = upblock_reference(x, weight, bias)
    max_err = float(jnp.max(jnp.abs(out - ref)))
    if max_err > 5e-2:
        raise AssertionError(f"mismatch vs reference, max abs err = {max_err}")

    print("KERNEL_OK")
</pallas_src>

<mosaic_0001>
module attributes {stable_mosaic.version = 11 : i64} {
  func.func @upblock_kernel(%arg0: i32, %arg1: memref<32x64xbf16, #tpu.memory_space<vmem>>, %arg2: memref<64x128xbf16, #tpu.memory_space<vmem>>, %arg3: memref<32x16xf32, #tpu.memory_space<vmem>>, %arg4: memref<1x128xf32, #tpu.memory_space<vmem>>, %arg5: memref<2x32x128xf32, #tpu.memory_space<vmem>>) attributes {dimension_semantics = [#tpu.dimension_semantics<parallel>], iteration_bounds = array<i64: 2>, scalar_prefetch = 0 : i64, scratch_operands = 0 : i64, tpu.core_type = #tpu.core_type<tc>, window_params = [{pipeline_mode = #tpu.pipeline_mode<synchronous>, transform_indices = @transform_0, window_bounds = array<i64: 32, 64>}, {transform_indices = @transform_1, window_bounds = array<i64: 64, 128>}, {pipeline_mode = #tpu.pipeline_mode<synchronous>, transform_indices = @transform_2, window_bounds = array<i64: 32, 16>}, {transform_indices = @transform_3, window_bounds = array<i64: 1, 128>}, {transform_indices = @transform_4, window_bounds = array<i64: 2, 32, 128>}]} {
    %c0 = arith.constant 0 : index
    %c0_0 = arith.constant 0 : index
    %0 = vector.load %arg1[%c0, %c0_0] : memref<32x64xbf16, #tpu.memory_space<vmem>>, vector<32x64xbf16>
    %c0_1 = arith.constant 0 : index
    %c0_2 = arith.constant 0 : index
    %1 = vector.load %arg2[%c0_1, %c0_2] : memref<64x128xbf16, #tpu.memory_space<vmem>>, vector<64x128xbf16>
    %cst = arith.constant dense<0.000000e+00> : vector<32x128xf32>
    %2 = tpu.matmul %0, %1, %cst {dimension_numbers = #tpu.dot_dimension_numbers<[1], [0], [0], [1], [0, 0, 1, 1], [], []>} : vector<32x64xbf16>, vector<64x128xbf16>, vector<32x128xf32> -> vector<32x128xf32>
    %c0_3 = arith.constant 0 : index
    %c0_4 = arith.constant 0 : index
    %3 = vector.load %arg3[%c0_3, %c0_4] : memref<32x16xf32, #tpu.memory_space<vmem>>, vector<32x16xf32>
    %c0_5 = arith.constant 0 : index
    %c0_6 = arith.constant 0 : index
    %4 = vector.load %arg4[%c0_5, %c0_6] : memref<1x128xf32, #tpu.memory_space<vmem>>, vector<1x128xf32>
    %5 = vector.extract_strided_slice %2 {offsets = [0, 0], sizes = [16, 128], strides = [1, 1]} : vector<32x128xf32> to vector<16x128xf32>
    %cst_7 = arith.constant dense<0.000000e+00> : vector<32x128xf32>
    %6 = tpu.matmul %3, %5, %cst_7 {dimension_numbers = #tpu.dot_dimension_numbers<[1], [0], [0], [1], [0, 0, 1, 1], [], []>} : vector<32x16xf32>, vector<16x128xf32>, vector<32x128xf32> -> vector<32x128xf32>
    %7 = vector.broadcast %4 : vector<1x128xf32> to vector<32x128xf32>
    %8 = arith.addf %6, %7 : vector<32x128xf32>
    %c0_8 = arith.constant 0 : index
    %c0_9 = arith.constant 0 : index
    %c0_10 = arith.constant 0 : index
    %9 = vector.load %arg5[%c0_8, %c0_9, %c0_10] : memref<2x32x128xf32, #tpu.memory_space<vmem>>, vector<1x32x128xf32>
    %10 = vector.shape_cast %9 : vector<1x32x128xf32> to vector<32x128xf32>
    %11 = vector.shape_cast %8 : vector<32x128xf32> to vector<1x32x128xf32>
    tpu.vector_store %arg5[%c0_8, %c0_9, %c0_10], %11 {strides = array<i32>} : memref<2x32x128xf32, #tpu.memory_space<vmem>>, vector<1x32x128xf32>,
    %12 = vector.extract_strided_slice %2 {offsets = [16, 0], sizes = [16, 128], strides = [1, 1]} : vector<32x128xf32> to vector<16x128xf32>
    %cst_11 = arith.constant dense<0.000000e+00> : vector<32x128xf32>
    %13 = tpu.matmul %3, %12, %cst_11 {dimension_numbers = #tpu.dot_dimension_numbers<[1], [0], [0], [1], [0, 0, 1, 1], [], []>} : vector<32x16xf32>, vector<16x128xf32>, vector<32x128xf32> -> vector<32x128xf32>
    %14 = vector.broadcast %4 : vector<1x128xf32> to vector<32x128xf32>
    %15 = arith.addf %13, %14 : vector<32x128xf32>
    %c1 = arith.constant 1 : index
    %c0_12 = arith.constant 0 : index
    %c0_13 = arith.constant 0 : index
    %16 = vector.load %arg5[%c1, %c0_12, %c0_13] : memref<2x32x128xf32, #tpu.memory_space<vmem>>, vector<1x32x128xf32>
    %17 = vector.shape_cast %16 : vector<1x32x128xf32> to vector<32x128xf32>
    %18 = vector.shape_cast %15 : vector<32x128xf32> to vector<1x32x128xf32>
    tpu.vector_store %arg5[%c1, %c0_12, %c0_13], %18 {strides = array<i32>} : memref<2x32x128xf32, #tpu.memory_space<vmem>>, vector<1x32x128xf32>,
    return
  }
  func.func @transform_0(%arg0: i32) -> (i32, i32) {
    %c0_i32 = arith.constant 0 : i32
    %c0_i32_0 = arith.constant 0 : i32
    %c0_i32_1 = arith.constant 0 : i32
    return %c0_i32, %c0_i32_0 : i32, i32
  }
  func.func @transform_1(%arg0: i32) -> (i32, i32) {
    %c0_i32 = arith.constant 0 : i32
    %c0_i32_0 = arith.constant 0 : i32
    return %c0_i32, %arg0 : i32, i32
  }
  func.func @transform_2(%arg0: i32) -> (i32, i32) {
    %c0_i32 = arith.constant 0 : i32
    %c0_i32_0 = arith.constant 0 : i32
    %c0_i32_1 = arith.constant 0 : i32
    return %c0_i32, %c0_i32_0 : i32, i32
  }
  func.func @transform_3(%arg0: i32) -> (i32, i32) {
    %c0_i32 = arith.constant 0 : i32
    %c0_i32_0 = arith.constant 0 : i32
    return %c0_i32, %arg0 : i32, i32
  }
  func.func @transform_4(%arg0: i32) -> (i32, i32, i32) {
    %c0_i32 = arith.constant 0 : i32
    %c0_i32_0 = arith.constant 0 : i32
    %c0_i32_1 = arith.constant 0 : i32
    return %c0_i32, %c0_i32_0, %arg0 : i32, i32, i32
  }
}

</mosaic_0001>

<llo_original>
// kernel: tpu_custom_call.1
$region0: #{tpu_custom_call.1}
  #allocation0 [shape = 'u32[]', space=smem, size = 0x4, offset = 0x4, fixed_abs, tag = 'smem constant byte address 0x4 - core index']
  #allocation1 [shape = 'u32[144,128]{1,0:T(1,128)}', space=vmem, size = 0x12000, scoped, tag = 'internal scratch']
  %s0 = inlined_call_operand.vmem [shape: bf16[32,64], index: 0, kind: input, shape index: {}]
  %s1 = inlined_call_operand.hbm [shape: bf16[64,256], index: 1, kind: input, shape index: {}]
  %s2 = inlined_call_operand.vmem [shape: f32[32,16], index: 2, kind: input, shape index: {}]
  %s3 = inlined_call_operand.vmem [shape: f32[1,256], index: 3, kind: input, shape index: {}]
  %s4 = inlined_call_operand.hbm [shape: f32[2,32,256], index: 4, kind: output, shape index: {}]
  %s5 = sld [smem:[#allocation0]]
  $region53: #{tpu_custom_call.1} parent=0
    _
  %s7 = ssub.s32 1, %s5
  %s8 = scalar_select 0, %s7, %s5
  $region1: #{tpu_custom_call.1} parent=0
    #allocation2 [shape = 'u8[32768]{0}', space=vmem, size = 0x8000, scoped, tag = 'input window, operand 1']
    #allocation3 [shape = 's32[2]{0}', space=sflag, size = 0x8, scoped, tag = 'scoped memory for tpu_custom_call.1']
    #allocation4 [shape = 's32[2]{0}', space=sflag, size = 0x8, scoped, tag = 'scoped memory for tpu_custom_call.1']
    #allocation5 [shape = 'u8[65536]{0}', space=vmem, size = 0x10000, scoped, tag = 'output window, operand 0']
    %9 = vsyncpa [#allocation3], 0
    %s10 = scalar_lea.sflag [#allocation3], 1
    %11 = vsyncpa %s10, 0
    %12 = vsyncpa [#allocation4], 0
    %s13 = scalar_lea.sflag [#allocation4], 1
    %14 = vsyncpa %s13, 0
    loop: start=0, step=1, limit=4
    $region2: #{tpu_custom_call.1} parent=1 // loop_pre_header
      _
    $region3: #{tpu_custom_call.1} parent=1 // loop_header
      %s16 = sphi 0, %s20
      %p17 = scmp.ge.s32.totalorder %s16, 4
      %s24 = sphi 0, %s24
      %s26 = sphi 0, %s24
      %s27 = sphi 0, %s26
      %s41 = sphi 0, %s27
      %s47 = sphi 0, %s49
      %s50 = sphi 0, %s47
      %s51 = sphi 0, %s50
      %s67 = sphi 0, %s51
      %s71 = sphi 0, %s71
      %s73 = sphi 0, %s71
      %s74 = sphi 0, %s73
      %s88 = sphi 0, %s74
      %s94 = sphi 0, %s96
      %s97 = sphi 0, %s94
      %s98 = sphi 0, %s97
      %s114 = sphi 0, %s98
      %s120 = sphi 0, %s122
      %s123 = sphi 0, %s120
      %s124 = sphi 0, %s123
      %s140 = sphi 0, %s124
    $region4: #{tpu_custom_call.1} parent=1 // loop_header_branch
      %19 = sbr.rel (%p17) target = $region8
    $region5: #{tpu_custom_call.1} parent=1 // loop_body
      %s21 = ssub.s32 %s16, 1
      %s22 = ssub.s32 %s16, 2
      %s23 = sadd.s32 %s16, 1
      %s25 = sadd.s32 %s24, 1
      %p28 = scmp.eq.s32.totalorder %s16, 1
      %p29 = scmp.ne.s32.totalorder %s24, %s26
      %p30 = scmp.eq.s32.totalorder %s16, 0
      %p31 = por %p29, %p30
      %p32 = scmp.ne.s32.totalorder %s24, %s26
      %p33 = scmp.eq.s32.totalorder %s21, 1
      %p34 = por %p32, %p33
      %p35 = scmp.ne.s32.totalorder %s26, %s27
      %p36 = scmp.eq.s32.totalorder %s21, 0
      %p37 = por %p35, %p36
      %p38 = scmp.ne.s32.totalorder %s26, %s27
      %p39 = scmp.eq.s32.totalorder %s22, 1
      %p40 = por %p38, %p39
      %p42 = scmp.ne.s32.totalorder %s27, %s41
      %p43 = scmp.eq.s32.totalorder %s22, 0
      %p44 = por %p42, %p43
      %s45 = ssub.s32 %s16, %s23
      %p46 = scmp.eq.s32.totalorder %s45, 0
      %s48 = sadd.s32 %s47, 1
      %s49 = scalar_select %p46, %s47, %s48
      %p52 = pneg %p46
      %p53 = scmp.eq.s32.totalorder %s16, 1
      %p54 = por %p52, %p53
      %p55 = scmp.ne.s32.totalorder %s47, %s50
      %p56 = scmp.eq.s32.totalorder %s16, 0
      %p57 = por %p55, %p56
      %p58 = scmp.ne.s32.totalorder %s47, %s50
      %p59 = scmp.eq.s32.totalorder %s21, 1
      %p60 = por %p58, %p59
      %p61 = scmp.ne.s32.totalorder %s50, %s51
      %p62 = scmp.eq.s32.totalorder %s21, 0
      %p63 = por %p61, %p62
      %p64 = scmp.ne.s32.totalorder %s50, %s51
      %p65 = scmp.eq.s32.totalorder %s22, 1
      %p66 = por %p64, %p65
      %p68 = scmp.ne.s32.totalorder %s51, %s67
      %p69 = scmp.eq.s32.totalorder %s22, 0
      %p70 = por %p68, %p69
      %s72 = sadd.s32 %s71, 1
      %p75 = scmp.eq.s32.totalorder %s16, 1
      %p76 = scmp.ne.s32.totalorder %s71, %s73
      %p77 = scmp.eq.s32.totalorder %s16, 0
      %p78 = por %p76, %p77
      %p79 = scmp.ne.s32.totalorder %s71, %s73
      %p80 = scmp.eq.s32.totalorder %s21, 1
      %p81 = por %p79, %p80
      %p82 = scmp.ne.s32.totalorder %s73, %s74
      %p83 = scmp.eq.s32.totalorder %s21, 0
      %p84 = por %p82, %p83
      %p85 = scmp.ne.s32.totalorder %s73, %s74
      %p86 = scmp.eq.s32.totalorder %s22, 1
      %p87 = por %p85, %p86
      %p89 = scmp.ne.s32.totalorder %s74, %s88
      %p90 = scmp.eq.s32.totalorder %s22, 0
      %p91 = por %p89, %p90
      %s92 = ssub.s32 %s16, %s23
      %p93 = scmp.eq.s32.totalorder %s92, 0
      %s95 = sadd.s32 %s94, 1
      %s96 = scalar_select %p93, %s94, %s95
      %p99 = pneg %p93
      %p100 = scmp.eq.s32.totalorder %s16, 1
      %p101 = por %p99, %p100
      %p102 = scmp.ne.s32.totalorder %s94, %s97
      %p103 = scmp.eq.s32.totalorder %s16, 0
      %p104 = por %p102, %p103
      %p105 = scmp.ne.s32.totalorder %s94, %s97
      %p106 = scmp.eq.s32.totalorder %s21, 1
      %p107 = por %p105, %p106
      %p108 = scmp.ne.s32.totalorder %s97, %s98
      %p109 = scmp.eq.s32.totalorder %s21, 0
      %p110 = por %p108, %p109
      %p111 = scmp.ne.s32.totalorder %s97, %s98
      %p112 = scmp.eq.s32.totalorder %s22, 1
      %p113 = por %p111, %p112
      %p115 = scmp.ne.s32.totalorder %s98, %s114
      %p116 = scmp.eq.s32.totalorder %s22, 0
      %p117 = por %p115, %p116
      %s118 = ssub.s32 %s16, %s23
      %p119 = scmp.eq.s32.totalorder %s118, 0
      %s121 = sadd.s32 %s120, 1
      %s122 = scalar_select %p119, %s120, %s121
      %p125 = pneg %p119
      %p126 = scmp.eq.s32.totalorder %s16, 1
      %p127 = por %p125, %p126
      %p128 = scmp.ne.s32.totalorder %s120, %s123
      %p129 = scmp.eq.s32.totalorder %s16, 0
      %p130 = por %p128, %p129
      %p131 = scmp.ne.s32.totalorder %s120, %s123
      %p132 = scmp.eq.s32.totalorder %s21, 1
      %p133 = por %p131, %p132
      %p134 = scmp.ne.s32.totalorder %s123, %s124
      %p135 = scmp.eq.s32.totalorder %s21, 0
      %p136 = por %p134, %p135
      %p137 = scmp.ne.s32.totalorder %s123, %s124
      %p138 = scmp.eq.s32.totalorder %s22, 1
      %p139 = por %p137, %p138
      %p141 = scmp.ne.s32.totalorder %s124, %s140
      %p142 = scmp.eq.s32.totalorder %s22, 0
      %p143 = por %p141, %p142
      %p144 = scmp.le.s32.totalorder 1, %s16
      %p145 = scmp.lt.s32.totalorder %s16, 3
      %p146 = pnand %p144, %p145
      %p147 = pneg %p146
      // Predicated region
      $region9: #{tpu_custom_call.1} parent=5 // pred_check
        _
      $region10: #{tpu_custom_call.1} parent=5 // pred_check_branch
        %149 = sbr.rel (%p146) target = $region12
      $region11: #{tpu_custom_call.1} parent=5 // pred_region
        %s150 = ssub.s32 %s16, 1
        // Predicated region
        $region13: #{tpu_custom_call.1} parent=11 // pred_check
          %p151 = pneg %p37
        $region14: #{tpu_custom_call.1} parent=11 // pred_check_branch
          %153 = sbr.rel (%p151) target = $region16
        $region15: #{tpu_custom_call.1} parent=11 // pred_region
          _
        $region16: #{tpu_custom_call.1} parent=11 // pred_fallthru
          _
        // Predicated region
        $region17: #{tpu_custom_call.1} parent=11 // pred_check
          %p154 = pneg %p84
        $region18: #{tpu_custom_call.1} parent=11 // pred_check_branch
          %156 = sbr.rel (%p154) target = $region20
        $region19: #{tpu_custom_call.1} parent=11 // pred_region
          _
        $region20: #{tpu_custom_call.1} parent=11 // pred_fallthru
          _
      $region12: #{tpu_custom_call.1} parent=5 // pred_fallthru
        _
      %p157 = scmp.lt.s32.totalorder %s16, 2
      // Predicated region
      $region21: #{tpu_custom_call.1} parent=5 // pred_check
        %p158 = pneg %p157
      $region22: #{tpu_custom_call.1} parent=5 // pred_check_branch
        %160 = sbr.rel (%p158) target = $region24
      $region23: #{tpu_custom_call.1} parent=5 // pred_region
        // Predicated region
        $region25: #{tpu_custom_call.1} parent=23 // pred_check
          %p161 = pneg %p57
        $region26: #{tpu_custom_call.1} parent=23 // pred_check_branch
          %163 = sbr.rel (%p161) target = $region28
        $region27: #{tpu_custom_call.1} parent=23 // pred_region
          %s164 = sand.u32 %s47, 1
          %s165 = scalar_lea.sflag [#allocation3], %s164
          %s166 = sand.u32 %s47, 1
          %s167 = smul.addr %s166, 32
          %s168 = scalar_lea.vmem [#allocation2], %s167
          %s170 = ssub.s32 512, 512
          %171 = vsyncadd %s165, %s170
          %s172 = smul.addr %s16, 64
          %s173 = scalar_lea.hbm %s1, %s172
          %s174 = sshll.u32 %s168, 4
          %s175 = int_to_ptr.vmem [resolvable:$true] %s174
          %180 = dma.hbm_to_vmem [thread:$0]  %s173, 512, %s175, %s165, 128, 64, 4
        $region28: #{tpu_custom_call.1} parent=23 // pred_fallthru
          _
        // Predicated region
        $region29: #{tpu_custom_call.1} parent=23 // pred_check
          %p181 = pneg %p104
        $region30: #{tpu_custom_call.1} parent=23 // pred_check_branch
          %183 = sbr.rel (%p181) target = $region32
        $region31: #{tpu_custom_call.1} parent=23 // pred_region
          %p184 = scmp.lt.s32.totalorder %s16, 1
          %s185 = scalar_select %p184, %s16, 1
          %s186 = scalar_lea.vmem %s3, %s185
        $region32: #{tpu_custom_call.1} parent=23 // pred_fallthru
          _
      $region24: #{tpu_custom_call.1} parent=5 // pred_fallthru
        _
      %p187 = scmp.le.s32.totalorder 1, %s16
      %p188 = scmp.lt.s32.totalorder %s16, 3
      %p189 = pnand %p187, %p188
      %p190 = pneg %p189
      // Predicated region
      $region33: #{tpu_custom_call.1} parent=5 // pred_check
        _
      $region34: #{tpu_custom_call.1} parent=5 // pred_check_branch
        %192 = sbr.rel (%p189) target = $region36
      $region35: #{tpu_custom_call.1} parent=5 // pred_region
        %s193 = ssub.s32 %s16, 1
        %s194 = sand.u32 %s50, 1
        %s195 = scalar_lea.sflag [#allocation3], %s194
        %s196 = sand.u32 %s50, 1
        %s197 = smul.addr %s196, 32
        %s198 = scalar_lea.vmem [#allocation2], %s197
        // Predicated region
        $region37: #{tpu_custom_call.1} parent=35 // pred_check
          %p199 = pneg %p63
        $region38: #{tpu_custom_call.1} parent=35 // pred_check_branch
          %201 = sbr.rel (%p199) target = $region40
        $region39: #{tpu_custom_call.1} parent=35 // pred_region
          %202 = dma.done %s195, 512
        $region40: #{tpu_custom_call.1} parent=35 // pred_fallthru
          _
        %p203 = pneg %p37
        %p204 = pneg %p34
        %s205 = sand.u32 %s50, 1
        %s206 = scalar_lea.sflag [#allocation3], %s205
        %s207 = sand.u32 %s50, 1
        %s208 = smul.addr %s207, 32
        %s209 = scalar_lea.vmem [#allocation2], %s208
        %p210 = pneg %p63
        %p211 = pneg %p60
        %p212 = pneg %p84
        %p213 = pneg %p81
        %p214 = scmp.lt.s32.totalorder %s21, 1
        %s215 = scalar_select %p214, %s21, 1
        %s216 = scalar_lea.vmem %s3, %s215
        %p217 = pneg %p110
        %p218 = pneg %p107
        %p219 = pneg %p136
        %p220 = pneg %p133
        %s221 = sand.u32 %s123, 1
        %s222 = scalar_lea.sflag [#allocation4], %s221
        %s223 = sand.u32 %s123, 1
        %s224 = smul.addr %s223, 64
        %s225 = scalar_lea.vmem [#allocation5], %s224
        %p226 = scmp.lt.s32.totalorder %s21, 1
        %s227 = scalar_select %p226, %s21, 1
        %s228 = scalar_lea.vmem %s3, %s227
        %v230 = vld [vmem:[%s0] sm:$0xf]
        %v231 = vld [vmem:[%s0 + $0x4] sm:$0xf]
        %v232 = vld [vmem:[%s0 + $0x8] sm:$0xf]
        %v233 = vld [vmem:[%s0 + $0xc] sm:$0xf]
        %v234 = vld [vmem:[%s198] sm:$0xf]
        %v235 = vld [vmem:[%s198 + $0x4] sm:$0xf]
        %v236 = vld [vmem:[%s198 + $0x8] sm:$0xf]
        %v237 = vld [vmem:[%s198 + $0xc] sm:$0xf]
        %v238 = vld [vmem:[%s198 + $0x10] sm:$0xf]
        %v239 = vld [vmem:[%s198 + $0x14] sm:$0xf]
        %v240 = vld [vmem:[%s198 + $0x18] sm:$0xf]
        %v241 = vld [vmem:[%s198 + $0x1c] sm:$0xf]
        %v246 = vunpack.c.l.b16 %v230
        %v247 = vunpack.c.l.b16 %v231
        %v248 = vunpack.c.l.b16 %v232
        %v249 = vunpack.c.l.b16 %v233
        %v250 = vpack.c.b16 %v247, %v246
        %v251 = vpack.c.b16 %v249, %v248
        %v260 = vunpack.c.l.b16 %v234
        %v261 = vunpack.c.l.b16 %v235
        %v262 = vunpack.c.l.b16 %v236
        %v263 = vunpack.c.l.b16 %v237
        %v264 = vunpack.c.l.b16 %v238
        %v265 = vunpack.c.l.b16 %v239
        %v266 = vunpack.c.l.b16 %v240
        %v267 = vunpack.c.l.b16 %v241
        %v268 = vpack.c.b16 %v261, %v260
        %v269 = vpack.c.b16 %v263, %v262
        %v270 = vpack.c.b16 %v265, %v264
        %v271 = vpack.c.b16 %v267, %v266
        %vm276 = vcmask 523264
        %v278 = vsel %vm276, %v250, 0
        %v281 = vsel %vm276, %v251, 0
        %283 = vmatprep.subr.bf16.mxu0 0
        %284 = vmatpush1.bf16.msra.mxu0 %v268
        %285 = vmatprep.subr.bf16.mxu0 0
        %286 = vmatpush1.bf16.msra.mxu0 %v269
        %287 = vmatprep.subr.bf16.mxu0 0
        %288 = vmatpush1.bf16.msra.mxu0 %v270
        %289 = vmatprep.subr.bf16.mxu0 0
        %290 = vmatpush1.bf16.msra.mxu0 %v271
        %291 = vmatprep.subr.bf16.mxu0 0
        %292 = vmatpush1.bf16.msra.mxu0 0
        %293 = vmatprep.subr.bf16.mxu0 0
        %294 = vmatpush1.bf16.msra.mxu0 0
        %295 = vmatprep.subr.bf16.mxu0 0
        %296 = vmatpush1.bf16.msra.mxu0 0
        %297 = vmatprep.subr.bf16.mxu0 0
        %298 = vmatpush1.bf16.msra.mxu0 0
        %299 = vmatprep.subr.bf16.mxu0 0
        %300 = vmatpush1.bf16.msra.mxu0 0
        %301 = vmatprep.subr.bf16.mxu0 0
        %302 = vmatpush1.bf16.msra.mxu0 0
        %303 = vmatprep.subr.bf16.mxu0 0
        %304 = vmatpush1.bf16.msra.mxu0 0
        %305 = vmatprep.subr.bf16.mxu0 0
        %306 = vmatpush1.bf16.msra.mxu0 0
        %307 = vmatprep.subr.bf16.mxu0 0
        %308 = vmatpush1.bf16.msra.mxu0 0
        %309 = vmatprep.subr.bf16.mxu0 0
        %310 = vmatpush1.bf16.msra.mxu0 0
        %311 = vmatprep.subr.bf16.mxu0 0
        %312 = vmatpush1.bf16.msra.mxu0 0
        %313 = vmatprep.subr.bf16.mxu0 0
        %314 = vmatpush1.bf16.msra.mxu0 0
        %315 = vmatprep.mubr.bf16.mxu0 0
        %316 = vmatmul.mubr.bf16.gmra.mrb[0].mxu0 %v278
        %v317 = vpop.f32.mrb[0].mxu0
        %v318 = vadd.f32 0.0, %v317
        %v319 = vpop.f32.mrb[0].mxu0
        %v320 = vpop.f32.mrb[0].mxu0
        %v321 = vadd.f32 0.0, %v320
        %v322 = vpop.f32.mrb[0].mxu0
        %323 = vmatprep.mubr.bf16.mxu0 0
        %324 = vmatmul.mubr.bf16.gmra.mrb[0].mxu0 %v281
        %v325 = vpop.f32.mrb[0].mxu0
        %v326 = vadd.f32 0.0, %v325
        %v327 = vpop.f32.mrb[0].mxu0
        %v328 = vpop.f32.mrb[0].mxu0
        %v329 = vadd.f32 0.0, %v328
        %v330 = vpop.f32.mrb[0].mxu0
        %331 = vdwg.mxu0
        %v332 = vld [vmem:[%s2] sm:$0xff]
        %v333 = vld [vmem:[%s2 + $0x8] sm:$0xff]
        %v334 = vld [vmem:[%s2 + $0x10] sm:$0xff]
        %v335 = vld [vmem:[%s2 + $0x18] sm:$0xff]
        %v336 = vld [vmem:[%s228] sm:$0x1]
        %v338 = vlaneseq
        %v339 = vshrl.u32 %v338, 7
        %v340 = vsub.s32 0, %v339
        %v341 = vrot.slane %v336, %v340
        %vm343 = vcmask 130048
        %v345 = vsel %vm343, %v332, 0
        %v348 = vsel %vm343, %v333, 0
        %v351 = vsel %vm343, %v334, 0
        %v354 = vsel %vm343, %v335, 0
        %356 = vmatprep.subr.mxu0 0.0
        %357 = vmatpush1.msra.mxu0 %v318
        %358 = vmatprep.subr.mxu0 0.0
        %359 = vmatpush1.msra.mxu0 %v321
        %360 = vmatprep.subr.mxu0 0.0
        %361 = vmatpush1.msra.mxu0 0.0
        %362 = vmatprep.subr.mxu0 0.0
        %363 = vmatpush1.msra.mxu0 0.0
        %364 = vmatprep.subr.mxu0 0.0
        %365 = vmatpush1.msra.mxu0 0.0
        %366 = vmatprep.subr.mxu0 0.0
        %367 = vmatpush1.msra.mxu0 0.0
        %368 = vmatprep.subr.mxu0 0.0
        %369 = vmatpush1.msra.mxu0 0.0
        %370 = vmatprep.subr.mxu0 0.0
        %371 = vmatpush1.msra.mxu0 0.0
        %372 = vmatprep.subr.mxu0 0.0
        %373 = vmatpush1.msra.mxu0 0.0
        %374 = vmatprep.subr.mxu0 0.0
        %375 = vmatpush1.msra.mxu0 0.0
        %376 = vmatprep.subr.mxu0 0.0
        %377 = vmatpush1.msra.mxu0 0.0
        %378 = vmatprep.subr.mxu0 0.0
        %379 = vmatpush1.msra.mxu0 0.0
        %380 = vmatprep.subr.mxu0 0.0
        %381 = vmatpush1.msra.mxu0 0.0
        %382 = vmatprep.subr.mxu0 0.0
        %383 = vmatpush1.msra.mxu0 0.0
        %384 = vmatprep.subr.mxu0 0.0
        %385 = vmatpush1.msra.mxu0 0.0
        %386 = vmatprep.subr.mxu0 0.0
        %387 = vmatpush1.msra.mxu0 0.0
        %388 = vmatprep.subr.mxu0 0.0
        %389 = vmatpush1.msra.mxu0 0.0
        %390 = vmatprep.subr.mxu0 0.0
        %391 = vmatpush1.msra.mxu0 0.0
        %392 = vmatprep.subr.mxu0 0.0
        %393 = vmatpush1.msra.mxu0 0.0
        %394 = vmatprep.subr.mxu0 0.0
        %395 = vmatpush1.msra.mxu0 0.0
        %396 = vmatprep.subr.mxu0 0.0
        %397 = vmatpush1.msra.mxu0 0.0
        %398 = vmatprep.subr.mxu0 0.0
        %399 = vmatpush1.msra.mxu0 0.0
        %400 = vmatprep.subr.mxu0 0.0
        %401 = vmatpush1.msra.mxu0 0.0
        %402 = vmatprep.subr.mxu0 0.0
        %403 = vmatpush1.msra.mxu0 0.0
        %404 = vmatprep.subr.mxu0 0.0
        %405 = vmatpush1.msra.mxu0 0.0
        %406 = vmatprep.subr.mxu0 0.0
        %407 = vmatpush1.msra.mxu0 0.0
        %408 = vmatprep.subr.mxu0 0.0
        %409 = vmatpush1.msra.mxu0 0.0
        %410 = vmatprep.subr.mxu0 0.0
        %411 = vmatpush1.msra.mxu0 0.0
        %412 = vmatprep.subr.mxu0 0.0
        %413 = vmatpush1.msra.mxu0 0.0
        %414 = vmatprep.subr.mxu0 0.0
        %415 = vmatpush1.msra.mxu0 0.0
        %416 = vmatprep.subr.mxu0 0.0
        %417 = vmatpush1.msra.mxu0 0.0
        %418 = vmatprep.subr.mxu0 0.0
        %419 = vmatpush1.msra.mxu0 0.0
        %420 = vmatprep.mubr.f32.mxu0 0.0
        %421 = vmatmul.mubr.f32.gmra.mrb[0].mxu0 %v345
        %v422 = vpop.f32.mrb[0].mxu0
        %v423 = vadd.f32 %v341, %v422
        %v424 = vpop.f32.mrb[0].mxu0
        %425 = vmatprep.mubr.f32.mxu0 0.0
        %426 = vmatmul.mubr.f32.gmra.mrb[0].mxu0 %v348
        %v427 = vpop.f32.mrb[0].mxu0
        %v428 = vadd.f32 %v341, %v427
        %v429 = vpop.f32.mrb[0].mxu0
        %430 = vmatprep.mubr.f32.mxu0 0.0
        %431 = vmatmul.mubr.f32.gmra.mrb[0].mxu0 %v351
        %v432 = vpop.f32.mrb[0].mxu0
        %v433 = vadd.f32 %v341, %v432
        %v434 = vpop.f32.mrb[0].mxu0
        %435 = vmatprep.mubr.f32.mxu0 0.0
        %436 = vmatmul.mubr.f32.gmra.mrb[0].mxu0 %v354
        %v437 = vpop.f32.mrb[0].mxu0
        %v438 = vadd.f32 %v341, %v437
        %v439 = vpop.f32.mrb[0].mxu0
        %440 = vdwg.mxu0
        %441 = vst [vmem:[%s225] sm:$0xff] %v423
        %442 = vst [vmem:[%s225 + $0x8] sm:$0xff] %v428
        %443 = vst [vmem:[%s225 + $0x10] sm:$0xff] %v433
        %444 = vst [vmem:[%s225 + $0x18] sm:$0xff] %v438
        %445 = vmatprep.subr.mxu0 0.0
        %446 = vmatpush1.msra.mxu0 %v326
        %447 = vmatprep.subr.mxu0 0.0
        %448 = vmatpush1.msra.mxu0 %v329
        %449 = vmatprep.subr.mxu0 0.0
        %450 = vmatpush1.msra.mxu0 0.0
        %451 = vmatprep.subr.mxu0 0.0
        %452 = vmatpush1.msra.mxu0 0.0
        %453 = vmatprep.subr.mxu0 0.0
        %454 = vmatpush1.msra.mxu0 0.0
        %455 = vmatprep.subr.mxu0 0.0
        %456 = vmatpush1.msra.mxu0 0.0
        %457 = vmatprep.subr.mxu0 0.0
        %458 = vmatpush1.msra.mxu0 0.0
        %459 = vmatprep.subr.mxu0 0.0
        %460 = vmatpush1.msra.mxu0 0.0
        %461 = vmatprep.subr.mxu0 0.0
        %462 = vmatpush1.msra.mxu0 0.0
        %463 = vmatprep.subr.mxu0 0.0
        %464 = vmatpush1.msra.mxu0 0.0
        %465 = vmatprep.subr.mxu0 0.0
        %466 = vmatpush1.msra.mxu0 0.0
        %467 = vmatprep.subr.mxu0 0.0
        %468 = vmatpush1.msra.mxu0 0.0
        %469 = vmatprep.subr.mxu0 0.0
        %470 = vmatpush1.msra.mxu0 0.0
        %471 = vmatprep.subr.mxu0 0.0
        %472 = vmatpush1.msra.mxu0 0.0
        %473 = vmatprep.subr.mxu0 0.0
        %474 = vmatpush1.msra.mxu0 0.0
        %475 = vmatprep.subr.mxu0 0.0
        %476 = vmatpush1.msra.mxu0 0.0
        %477 = vmatprep.subr.mxu0 0.0
        %478 = vmatpush1.msra.mxu0 0.0
        %479 = vmatprep.subr.mxu0 0.0
        %480 = vmatpush1.msra.mxu0 0.0
        %481 = vmatprep.subr.mxu0 0.0
        %482 = vmatpush1.msra.mxu0 0.0
        %483 = vmatprep.subr.mxu0 0.0
        %484 = vmatpush1.msra.mxu0 0.0
        %485 = vmatprep.subr.mxu0 0.0
        %486 = vmatpush1.msra.mxu0 0.0
        %487 = vmatprep.subr.mxu0 0.0
        %488 = vmatpush1.msra.mxu0 0.0
        %489 = vmatprep.subr.mxu0 0.0
        %490 = vmatpush1.msra.mxu0 0.0
        %491 = vmatprep.subr.mxu0 0.0
        %492 = vmatpush1.msra.mxu0 0.0
        %493 = vmatprep.subr.mxu0 0.0
        %494 = vmatpush1.msra.mxu0 0.0
        %495 = vmatprep.subr.mxu0 0.0
        %496 = vmatpush1.msra.mxu0 0.0
        %497 = vmatprep.subr.mxu0 0.0
        %498 = vmatpush1.msra.mxu0 0.0
        %499 = vmatprep.subr.mxu0 0.0
        %500 = vmatpush1.msra.mxu0 0.0
        %501 = vmatprep.subr.mxu0 0.0
        %502 = vmatpush1.msra.mxu0 0.0
        %503 = vmatprep.subr.mxu0 0.0
        %504 = vmatpush1.msra.mxu0 0.0
        %505 = vmatprep.subr.mxu0 0.0
        %506 = vmatpush1.msra.mxu0 0.0
        %507 = vmatprep.subr.mxu0 0.0
        %508 = vmatpush1.msra.mxu0 0.0
        %509 = vmatprep.mubr.f32.mxu0 0.0
        %510 = vmatmul.mubr.f32.gmra.mrb[0].mxu0 %v345
        %v511 = vpop.f32.mrb[0].mxu0
        %v512 = vadd.f32 %v341, %v511
        %v513 = vpop.f32.mrb[0].mxu0
        %514 = vmatprep.mubr.f32.mxu0 0.0
        %515 = vmatmul.mubr.f32.gmra.mrb[0].mxu0 %v348
        %v516 = vpop.f32.mrb[0].mxu0
        %v517 = vadd.f32 %v341, %v516
        %v518 = vpop.f32.mrb[0].mxu0
        %519 = vmatprep.mubr.f32.mxu0 0.0
        %520 = vmatmul.mubr.f32.gmra.mrb[0].mxu0 %v351
        %v521 = vpop.f32.mrb[0].mxu0
        %v522 = vadd.f32 %v341, %v521
        %v523 = vpop.f32.mrb[0].mxu0
        %524 = vmatprep.mubr.f32.mxu0 0.0
        %525 = vmatmul.mubr.f32.gmra.mrb[0].mxu0 %v354
        %v526 = vpop.f32.mrb[0].mxu0
        %v527 = vadd.f32 %v341, %v526
        %v528 = vpop.f32.mrb[0].mxu0
        %529 = vdwg.mxu0
        %s530 = scalar_lea.vmem %s225, 32 [#allocation5]
        %531 = vst [vmem:[%s530] sm:$0xff] %v512
        %532 = vst [vmem:[%s530 + $0x8] sm:$0xff] %v517
        %533 = vst [vmem:[%s530 + $0x10] sm:$0xff] %v522
        %534 = vst [vmem:[%s530 + $0x18] sm:$0xff] %v527
        %s535 = sand.u32 %s123, 1
        %s536 = scalar_lea.sflag [#allocation4], %s535
        %s537 = sand.u32 %s123, 1
        %s538 = smul.addr %s537, 64
        %s539 = scalar_lea.vmem [#allocation5], %s538
        // Predicated region
        $region41: #{tpu_custom_call.1} parent=35 // pred_check
          %p540 = pneg %p133
        $region42: #{tpu_custom_call.1} parent=35 // pred_check_branch
          %542 = sbr.rel (%p540) target = $region44
        $region43: #{tpu_custom_call.1} parent=35 // pred_region
          %s544 = ssub.s32 1024, 1024
          %545 = vsyncadd %s536, %s544
          %s546 = smul.addr %s21, 128
          %s547 = scalar_lea.hbm %s4, %s546
          %s548 = sshll.u32 %s539, 4
          %s549 = int_to_ptr.vmem [resolvable:$true] %s548
          %554 = dma.vmem_to_hbm [thread:$0]  %s549, 1024, %s547, %s536, 128, 256, 8
        $region44: #{tpu_custom_call.1} parent=35 // pred_fallthru
          _
      $region36: #{tpu_custom_call.1} parent=5 // pred_fallthru
        _
      %p555 = scmp.le.s32.totalorder 2, %s16
      // Predicated region
      $region45: #{tpu_custom_call.1} parent=5 // pred_check
        %p556 = pneg %p555
      $region46: #{tpu_custom_call.1} parent=5 // pred_check_branch
        %558 = sbr.rel (%p556) target = $region48
      $region47: #{tpu_custom_call.1} parent=5 // pred_region
        %s559 = ssub.s32 %s16, 2
        // Predicated region
        $region49: #{tpu_custom_call.1} parent=47 // pred_check
          %p560 = pneg %p139
        $region50: #{tpu_custom_call.1} parent=47 // pred_check_branch
          %562 = sbr.rel (%p560) target = $region52
        $region51: #{tpu_custom_call.1} parent=47 // pred_region
          %s563 = sand.u32 %s124, 1
          %s564 = scalar_lea.sflag [#allocation4], %s563
          %s565 = sand.u32 %s124, 1
          %s566 = smul.addr %s565, 64
          %s567 = scalar_lea.vmem [#allocation5], %s566
          %568 = dma.done %s564, 1024
        $region52: #{tpu_custom_call.1} parent=47 // pred_fallthru
          _
      $region48: #{tpu_custom_call.1} parent=5 // pred_fallthru
        _
    $region6: #{tpu_custom_call.1} parent=1 // loop_footer
      %s20 = sadd.s32 1, %s16
    $region7: #{tpu_custom_call.1} parent=1 // loop_footer_branch
      %15 = sbr.rel target = $region3
    $region8: #{tpu_custom_call.1} parent=1 // loop_exit
      _
    %569 = vsyncpa [#allocation3], 1
    %s570 = scalar_lea.sflag [#allocation3], 1
    %571 = vsyncpa %s570, 1
    %572 = vsyncpa [#allocation4], 1
    %s573 = scalar_lea.sflag [#allocation4], 1
    %574 = vsyncpa %s573, 1

</llo_original>
